<compile_context>
chip_gen: v7x
topology: tpu7x:2x2x1
jax: 0.10.0
libtpu: 0.0.40
codegen_flags: <defaults>
</compile_context>

<pallas_src>
import functools

import jax
import jax.numpy as jnp
from jax.experimental import pallas as pl
from jax.experimental.pallas import tpu as pltpu


def _round_up(x, m):
    return ((x + m - 1) // m) * m


def _cdiv(a, b):
    return (a + b - 1) // b


def _chip_kind():
    try:
        return (jax.devices()[0].device_kind or "").lower()
    except Exception:
        return ""


def _wspec(shape, index_map, single_buffer):
    """BlockSpec, optionally single-buffered (resident weights)."""
    if single_buffer:
        try:
            return pl.BlockSpec(shape, index_map, pipeline_mode=pl.Buffered(1))
        except TypeError:  # older jax without pipeline_mode: default buffering
            pass
    return pl.BlockSpec(shape, index_map)


# ---------------------------------------------------------------------------
# Kernel:  grid = (batch_tiles, n_chunks); n is the trailing reduction axis.
# ---------------------------------------------------------------------------
def mlp_lora_kernel(x_ref, b1t_ref, a1t_ref, b2t_ref, a2t_ref, o_ref,
                    t1_ref, acc_ref):
    n = pl.program_id(1)
    bf16 = jnp.bfloat16
    f32 = jnp.float32

    @pl.when(n == 0)
    def _():
        # t1 = x @ B1^T : (TB, D) @ (D, R) -> (TB, R); independent of n.
        t1 = jnp.dot(x_ref[...], b1t_ref[...], preferred_element_type=f32)
        t1_ref[...] = t1.astype(bf16)
        acc_ref[...] = jnp.zeros_like(acc_ref)

    # h_chunk = (t1 @ A1^T[:, n]) ** 2 : (TB, R) @ (R, TN) -> (TB, TN)
    h = jnp.dot(t1_ref[...], a1t_ref[...], preferred_element_type=f32)
    h = h * h                                                     # f32 VPU
    # t2 += h_chunk @ B2^T[n, :] : (TB, TN) @ (TN, R) -> (TB, R)
    acc_ref[...] += jnp.dot(h.astype(bf16), b2t_ref[...],
                            preferred_element_type=f32)

    @pl.when(n == pl.num_programs(1) - 1)
    def _():
        # y = t2 @ A2^T : (TB, R) @ (R, O_out) -> (TB, O_out)
        y = jnp.dot(acc_ref[...].astype(bf16), a2t_ref[...],
                    preferred_element_type=f32)
        o_ref[...] = y.astype(o_ref.dtype)


# ---------------------------------------------------------------------------
# Wrapper
# ---------------------------------------------------------------------------
@functools.partial(jax.jit, static_argnames=("tile_b", "tile_n"))
def mlp_lora_forward(x, a1, b1, a2, b2, *, tile_b=None, tile_n=None):
    B, D = x.shape
    N, r = a1.shape
    O, r2 = a2.shape
    assert b1.shape == (r, D) and b2.shape == (r2, N) and r == r2

    kind = _chip_kind()
    is_v7 = ("v7" in kind) or ("tpu7" in kind) or ("7x" in kind)
    is_v6 = ("v6" in kind) or ("6e" in kind)

    # ---- batch tile (per-chip) -------------------------------------------
    if tile_b is None:
        if B <= 128:
            tile_b = _round_up(max(B, 16), 16)        # bf16 packs 16 rows/vreg
        elif is_v7:
            # >=2 batch tiles so both v7x TensorCores get work (parallel axis).
            tile_b = min(256, _round_up(_cdiv(B, 2), 16))
        elif is_v6 and B >= 256:
            tile_b = 256                              # v6e MXU is 2x256^2
        else:
            tile_b = 128                              # v5e (4x128^2) / default
    B_pad = _round_up(B, tile_b)
    num_b = B_pad // tile_b

    # ---- rank padding: lane-dense t1/t2 ------------------------------------
    R = _round_up(r, 128)

    # ---- hidden-dim chunking: bounds the (tile_b, N) f32 intermediate ------
    if tile_n is None:
        tile_n = N if N <= 512 else 512
    if tile_n >= N:
        tile_n, N_pad = N, N
    else:
        assert tile_n % 128 == 0, "tile_n must be a multiple of 128"
        N_pad = _round_up(N, tile_n)
    num_n = N_pad // tile_n

    # ---- output padding only when it is cheap relative to its benefit ------
    O_out = _round_up(O, 128) if O >= 128 else O

    bf16 = jnp.bfloat16
    xc = x.astype(bf16)
    if B_pad != B:
        xc = jnp.pad(xc, ((0, B_pad - B), (0, 0)))

    # Pre-transposed, zero-padded bf16 weights (one-time XLA ops outside the
    # kernel); every in-kernel dot is then canonical (M,K)@(K,N).
    b1t = jnp.pad(b1.T.astype(bf16), ((0, 0), (0, R - r)))            # (D, R)
    a1t = jnp.pad(a1.T.astype(bf16), ((0, R - r), (0, N_pad - N)))    # (R, N_pad)
    b2t = jnp.pad(b2.T.astype(bf16), ((0, N_pad - N), (0, R - r)))    # (N_pad, R)
    a2t = jnp.pad(a2.T.astype(bf16), ((0, R - r), (0, O_out - O)))    # (R, O_out)

    in_specs = [
        pl.BlockSpec((tile_b, D), lambda i, n: (i, 0)),               # x tile
        _wspec((D, R), lambda i, n: (0, 0), True),                    # B1^T resident
        _wspec((R, tile_n), lambda i, n: (0, n), num_n == 1),         # A1^T chunked
        _wspec((tile_n, R), lambda i, n: (n, 0), num_n == 1),         # B2^T chunked
        _wspec((R, O_out), lambda i, n: (0, 0), True),                # A2^T resident
    ]
    out_spec = pl.BlockSpec((tile_b, O_out), lambda i, n: (i, 0))

    scratch = [
        pltpu.VMEM((tile_b, R), jnp.bfloat16),   # t1 (x @ B1^T), kept bf16
        pltpu.VMEM((tile_b, R), jnp.float32),    # t2 accumulator
    ]

    # Advisory cost estimate (4 matmuls + elementwise square).
    flops = 2 * B_pad * R * (D + 2 * N_pad + O_out) + B_pad * N_pad
    out_itemsize = jnp.dtype(x.dtype).itemsize
    bytes_accessed = 2 * (xc.size + b1t.size + a1t.size + b2t.size + a2t.size) \
        + B_pad * O_out * out_itemsize

    vmem_limit = (48 if is_v7 else 64) * 1024 * 1024   # v7x has 64 MiB VMEM

    out = pl.pallas_call(
        mlp_lora_kernel,
        out_shape=jax.ShapeDtypeStruct((B_pad, O_out), x.dtype),
        grid=(num_b, num_n),
        in_specs=in_specs,
        out_specs=out_spec,
        scratch_shapes=scratch,
        compiler_params=pltpu.CompilerParams(
            dimension_semantics=("parallel", "arbitrary"),
            vmem_limit_bytes=vmem_limit,
        ),
        cost_estimate=pl.CostEstimate(
            flops=int(flops), transcendentals=0,
            bytes_accessed=int(bytes_accessed)),
    )(xc, b1t, a1t, b2t, a2t)

    if B_pad != B or O_out != O:
        out = out[:B, :O]
    return out


# ---------------------------------------------------------------------------
# Module-matching init helpers (for the test harness)
# ---------------------------------------------------------------------------
def spectral_initialize(weight, rank):
    """Mirror of SimpleMLP_LoRA.spectral_initialize: weight (out, in) -> (A, B)."""
    u, s, vh = jnp.linalg.svd(weight, full_matrices=False)
    u = u[:, :rank]
    vh = vh[:rank, :]
    s = s[:rank]
    sqrt_s = jnp.sqrt(s)
    a = u * sqrt_s[None, :]          # U @ diag(sqrt(S))   -> (out, rank)
    b = sqrt_s[:, None] * vh         # diag(sqrt(S)) @ V^T -> (rank, in)
    return a, b


def linear_weight(key, out_features, in_features):
    """Deterministic nn.Linear-style init: U(-1/sqrt(fan_in), 1/sqrt(fan_in))."""
    bound = 1.0 / jnp.sqrt(jnp.float32(in_features))
    return jax.random.uniform(key, (out_features, in_features),
                              dtype=jnp.float32, minval=-bound, maxval=bound)


if __name__ == "__main__":
    # Small shapes consistent with the module.
    batch, input_dim, hidden_dim, output_dim = 8, 32, 64, 16
    rank = 16
    beta = 1.0
    scale = 1  # forward() never uses `scale`; it only scales __init__ caches.

    key = jax.random.PRNGKey(0)
    k_x, k_w1, k_w2 = jax.random.split(key, 3)

    w1_full = linear_weight(k_w1, hidden_dim, input_dim) * beta   # layer1.weight
    w2_full = linear_weight(k_w2, output_dim, hidden_dim)         # layer2.weight

    a1, b1 = spectral_initialize(w1_full, rank)   # (N, r), (r, D)
    a2, b2 = spectral_initialize(w2_full, rank)   # (O, r), (r, N)

    x = jax.random.normal(k_x, (batch, input_dim), dtype=jnp.float32)

    y = jax.block_until_ready(mlp_lora_forward(x, a1, b1, a2, b2))
    assert y.shape == (batch, output_dim)
    assert y.dtype == x.dtype

    # Reference 1: identical association / mixed precision as the kernel.
    def ref_mixed(x, a1, b1, a2, b2):
        bf, f32 = jnp.bfloat16, jnp.float32
        t1 = jnp.dot(x.astype(bf), b1.T.astype(bf), preferred_element_type=f32)
        h = jnp.dot(t1.astype(bf), a1.T.astype(bf), preferred_element_type=f32)
        h = h * h
        t2 = jnp.dot(h.astype(bf), b2.T.astype(bf), preferred_element_type=f32)
        return jnp.dot(t2.astype(bf), a2.T.astype(bf), preferred_element_type=f32)

    y_ref_mixed = ref_mixed(x, a1, b1, a2, b2)
    assert jnp.allclose(y, y_ref_mixed, rtol=1e-2, atol=1e-3), \
        "mismatch vs mixed-precision reference"

    # Reference 2: full f32 (module semantics) — loose tolerance since the
    # kernel uses bf16 MXU operands (documented precision contract).
    w1 = a1 @ b1
    w2 = a2 @ b2
    y_ref_f32 = ((x @ w1.T) ** 2) @ w2.T
    assert jnp.allclose(y, y_ref_f32, rtol=5e-2, atol=5e-2), \
        "mismatch vs f32 reference"

    print("KERNEL_OK")
</pallas_src>

<mosaic_0001>
module attributes {stable_mosaic.version = 11 : i64} {
  func.func @mlp_lora_kernel(%arg0: i32, %arg1: i32, %arg2: memref<16x32xbf16, #tpu.memory_space<vmem>>, %arg3: memref<32x128xbf16, #tpu.memory_space<vmem>>, %arg4: memref<128x64xbf16, #tpu.memory_space<vmem>>, %arg5: memref<64x128xbf16, #tpu.memory_space<vmem>>, %arg6: memref<128x16xbf16, #tpu.memory_space<vmem>>, %arg7: memref<16x16xf32, #tpu.memory_space<vmem>>, %arg8: memref<16x128xbf16, #tpu.memory_space<vmem>>, %arg9: memref<16x128xf32, #tpu.memory_space<vmem>>) attributes {dimension_semantics = [#tpu.dimension_semantics<parallel>, #tpu.dimension_semantics<arbitrary>], iteration_bounds = array<i64: 1, 1>, scalar_prefetch = 0 : i64, scratch_operands = 2 : i64, tpu.core_type = #tpu.core_type<tc>, window_params = [{transform_indices = @transform_0, window_bounds = array<i64: 16, 32>}, {pipeline_mode = #tpu.pipeline_mode<synchronous>, transform_indices = @transform_1, window_bounds = array<i64: 32, 128>}, {pipeline_mode = #tpu.pipeline_mode<synchronous>, transform_indices = @transform_2, window_bounds = array<i64: 128, 64>}, {pipeline_mode = #tpu.pipeline_mode<synchronous>, transform_indices = @transform_3, window_bounds = array<i64: 64, 128>}, {pipeline_mode = #tpu.pipeline_mode<synchronous>, transform_indices = @transform_4, window_bounds = array<i64: 128, 16>}, {transform_indices = @transform_5, window_bounds = array<i64: 16, 16>}]} {
    %c0_i32 = arith.constant 0 : i32
    %0 = arith.cmpi eq, %arg1, %c0_i32 : i32
    %1 = arith.extui %0 : i1 to i32
    %c0_i32_0 = arith.constant 0 : i32
    %2 = arith.cmpi ne, %1, %c0_i32_0 : i32
    scf.if %2 {
      %c0_13 = arith.constant 0 : index
      %c0_14 = arith.constant 0 : index
      %16 = vector.load %arg2[%c0_13, %c0_14] : memref<16x32xbf16, #tpu.memory_space<vmem>>, vector<16x32xbf16>
      %c0_15 = arith.constant 0 : index
      %c0_16 = arith.constant 0 : index
      %17 = vector.load %arg3[%c0_15, %c0_16] : memref<32x128xbf16, #tpu.memory_space<vmem>>, vector<32x128xbf16>
      %cst_17 = arith.constant dense<0.000000e+00> : vector<16x128xf32>
      %18 = tpu.matmul %16, %17, %cst_17 {dimension_numbers = #tpu.dot_dimension_numbers<[1], [0], [0], [1], [0, 0, 1, 1], [], []>} : vector<16x32xbf16>, vector<32x128xbf16>, vector<16x128xf32> -> vector<16x128xf32>
      %19 = arith.truncf %18 : vector<16x128xf32> to vector<16x128xbf16>
      %c0_18 = arith.constant 0 : index
      %c0_19 = arith.constant 0 : index
      %20 = vector.load %arg8[%c0_18, %c0_19] : memref<16x128xbf16, #tpu.memory_space<vmem>>, vector<16x128xbf16>
      tpu.vector_store %arg8[%c0_18, %c0_19], %19 {strides = array<i32>} : memref<16x128xbf16, #tpu.memory_space<vmem>>, vector<16x128xbf16>,
      %cst_20 = arith.constant 0.000000e+00 : f32
      %21 = vector.broadcast %cst_20 : f32 to vector<16x128xf32>
      %c0_21 = arith.constant 0 : index
      %c0_22 = arith.constant 0 : index
      %22 = vector.load %arg9[%c0_21, %c0_22] : memref<16x128xf32, #tpu.memory_space<vmem>>, vector<16x128xf32>
      tpu.vector_store %arg9[%c0_21, %c0_22], %21 {strides = array<i32>} : memref<16x128xf32, #tpu.memory_space<vmem>>, vector<16x128xf32>,
    } else {
    }
    %c0 = arith.constant 0 : index
    %c0_1 = arith.constant 0 : index
    %3 = vector.load %arg8[%c0, %c0_1] : memref<16x128xbf16, #tpu.memory_space<vmem>>, vector<16x128xbf16>
    %c0_2 = arith.constant 0 : index
    %c0_3 = arith.constant 0 : index
    %4 = vector.load %arg4[%c0_2, %c0_3] : memref<128x64xbf16, #tpu.memory_space<vmem>>, vector<128x64xbf16>
    %cst = arith.constant dense<0.000000e+00> : vector<16x64xf32>
    %5 = tpu.matmul %3, %4, %cst {dimension_numbers = #tpu.dot_dimension_numbers<[1], [0], [0], [1], [0, 0, 1, 1], [], []>} : vector<16x128xbf16>, vector<128x64xbf16>, vector<16x64xf32> -> vector<16x64xf32>
    %6 = arith.mulf %5, %5 : vector<16x64xf32>
    %c0_4 = arith.constant 0 : index
    %c0_5 = arith.constant 0 : index
    %7 = vector.load %arg9[%c0_4, %c0_5] : memref<16x128xf32, #tpu.memory_space<vmem>>, vector<16x128xf32>
    %8 = arith.truncf %6 : vector<16x64xf32> to vector<16x64xbf16>
    %c0_6 = arith.constant 0 : index
    %c0_7 = arith.constant 0 : index
    %9 = vector.load %arg5[%c0_6, %c0_7] : memref<64x128xbf16, #tpu.memory_space<vmem>>, vector<64x128xbf16>
    %cst_8 = arith.constant dense<0.000000e+00> : vector<16x128xf32>
    %10 = tpu.matmul %8, %9, %cst_8 {dimension_numbers = #tpu.dot_dimension_numbers<[1], [0], [0], [1], [0, 0, 1, 1], [], []>} : vector<16x64xbf16>, vector<64x128xbf16>, vector<16x128xf32> -> vector<16x128xf32>
    %11 = arith.addf %7, %10 : vector<16x128xf32>
    %c0_9 = arith.constant 0 : index
    %c0_10 = arith.constant 0 : index
    %12 = vector.load %arg9[%c0_9, %c0_10] : memref<16x128xf32, #tpu.memory_space<vmem>>, vector<16x128xf32>
    tpu.vector_store %arg9[%c0_9, %c0_10], %11 {strides = array<i32>} : memref<16x128xf32, #tpu.memory_space<vmem>>, vector<16x128xf32>,
    %c0_i32_11 = arith.constant 0 : i32
    %13 = arith.cmpi eq, %arg1, %c0_i32_11 : i32
    %14 = arith.extui %13 : i1 to i32
    %c0_i32_12 = arith.constant 0 : i32
    %15 = arith.cmpi ne, %14, %c0_i32_12 : i32
    scf.if %15 {
      %c0_13 = arith.constant 0 : index
      %c0_14 = arith.constant 0 : index
      %16 = vector.load %arg9[%c0_13, %c0_14] : memref<16x128xf32, #tpu.memory_space<vmem>>, vector<16x128xf32>
      %17 = arith.truncf %16 : vector<16x128xf32> to vector<16x128xbf16>
      %c0_15 = arith.constant 0 : index
      %c0_16 = arith.constant 0 : index
      %18 = vector.load %arg6[%c0_15, %c0_16] : memref<128x16xbf16, #tpu.memory_space<vmem>>, vector<128x16xbf16>
      %cst_17 = arith.constant dense<0.000000e+00> : vector<16x16xf32>
      %19 = tpu.matmul %17, %18, %cst_17 {dimension_numbers = #tpu.dot_dimension_numbers<[1], [0], [0], [1], [0, 0, 1, 1], [], []>} : vector<16x128xbf16>, vector<128x16xbf16>, vector<16x16xf32> -> vector<16x16xf32>
      %c0_18 = arith.constant 0 : index
      %c0_19 = arith.constant 0 : index
      %20 = vector.load %arg7[%c0_18, %c0_19] : memref<16x16xf32, #tpu.memory_space<vmem>>, vector<16x16xf32>
      tpu.vector_store %arg7[%c0_18, %c0_19], %19 {strides = array<i32>} : memref<16x16xf32, #tpu.memory_space<vmem>>, vector<16x16xf32>,
    } else {
    }
    return
  }
  func.func @transform_0(%arg0: i32, %arg1: i32) -> (i32, i32) {
    %c0_i32 = arith.constant 0 : i32
    %c0_i32_0 = arith.constant 0 : i32
    return %arg0, %c0_i32 : i32, i32
  }
  func.func @transform_1(%arg0: i32, %arg1: i32) -> (i32, i32) {
    %c0_i32 = arith.constant 0 : i32
    %c0_i32_0 = arith.constant 0 : i32
    %c0_i32_1 = arith.constant 0 : i32
    return %c0_i32, %c0_i32_0 : i32, i32
  }
  func.func @transform_2(%arg0: i32, %arg1: i32) -> (i32, i32) {
    %c0_i32 = arith.constant 0 : i32
    %c0_i32_0 = arith.constant 0 : i32
    return %c0_i32, %arg1 : i32, i32
  }
  func.func @transform_3(%arg0: i32, %arg1: i32) -> (i32, i32) {
    %c0_i32 = arith.constant 0 : i32
    %c0_i32_0 = arith.constant 0 : i32
    return %arg1, %c0_i32 : i32, i32
  }
  func.func @transform_4(%arg0: i32, %arg1: i32) -> (i32, i32) {
    %c0_i32 = arith.constant 0 : i32
    %c0_i32_0 = arith.constant 0 : i32
    %c0_i32_1 = arith.constant 0 : i32
    return %c0_i32, %c0_i32_0 : i32, i32
  }
  func.func @transform_5(%arg0: i32, %arg1: i32) -> (i32, i32) {
    %c0_i32 = arith.constant 0 : i32
    %c0_i32_0 = arith.constant 0 : i32
    return %arg0, %c0_i32 : i32, i32
  }
}

</mosaic_0001>

<llo_original>
// kernel: mlp_lora_forward.1
$region0: #{mlp_lora_forward.1}
  #allocation0 [shape = 'u32[]', space=smem, size = 0x4, offset = 0x4, fixed_abs, tag = 'smem constant byte address 0x4 - core index']
  #allocation1 [shape = 'u32[144,128]{1,0:T(1,128)}', space=vmem, size = 0x12000, scoped, tag = 'internal scratch']
  #allocation2 [shape = 'bf16[16,128]{1,0:T(16,128)(2,1)}', space=vmem, size = 0x1000, scoped, tag = 'scratch operand']
  #allocation3 [shape = 'f32[16,128]{1,0:T(8,128)}', space=vmem, size = 0x2000, scoped, tag = 'scratch operand']
  %s0 = inlined_call_operand.hbm [shape: bf16[16,32], index: 0, kind: input, shape index: {}]
  %s1 = inlined_call_operand.hbm [shape: bf16[32,128], index: 1, kind: input, shape index: {}]
  %s2 = inlined_call_operand.hbm [shape: bf16[128,64], index: 2, kind: input, shape index: {}]
  %s3 = inlined_call_operand.hbm [shape: bf16[64,128], index: 3, kind: input, shape index: {}]
  %s4 = inlined_call_operand.hbm [shape: bf16[128,16], index: 4, kind: input, shape index: {}]
  %s5 = inlined_call_operand.hbm [shape: f32[16,16], index: 5, kind: output, shape index: {}]
  %s6 = sld [smem:[#allocation0]]
  $region58: #{mlp_lora_forward.1} parent=0
    _
  %s8 = ssub.s32 1, %s6
  %s9 = scalar_select 0, %s8, %s6
  $region1: #{mlp_lora_forward.1} parent=0
    #allocation4 [shape = 'u8[4096]{0}', space=vmem, size = 0x1000, scoped, tag = 'input window, operand 0, single buffered']
    #allocation5 [shape = 's32[1]{0}', space=sflag, size = 0x4, scoped, tag = 'scoped memory for mlp_lora_forward.1']
    #allocation6 [shape = 's32[1]{0}', space=sflag, size = 0x4, scoped, tag = 'scoped memory for mlp_lora_forward.1']
    #allocation7 [shape = 'u8[8192]{0}', space=vmem, size = 0x2000, scoped, tag = 'input window, operand 1, single buffered']
    #allocation8 [shape = 's32[1]{0}', space=sflag, size = 0x4, scoped, tag = 'scoped memory for mlp_lora_forward.1']
    #allocation9 [shape = 'u8[32768]{0}', space=vmem, size = 0x8000, scoped, tag = 'input window, operand 2, single buffered']
    #allocation10 [shape = 'u8[16384]{0}', space=vmem, size = 0x4000, scoped, tag = 'input window, operand 3, single buffered']
    #allocation11 [shape = 's32[1]{0}', space=sflag, size = 0x4, scoped, tag = 'scoped memory for mlp_lora_forward.1']
    #allocation12 [shape = 'u8[32768]{0}', space=vmem, size = 0x8000, scoped, tag = 'input window, operand 4, single buffered']
    #allocation13 [shape = 'u8[8192]{0}', space=vmem, size = 0x2000, scoped, tag = 'output window, operand 0, single buffered']
    %10 = vsyncpa [#allocation5], 0
    %11 = vsyncpa [#allocation8], 0
    %12 = vsyncpa [#allocation11], 0
    %13 = vsyncpa [#allocation6], 0
    // Predicated region
    $region2: #{mlp_lora_forward.1} parent=1 // pred_check
      _
    $region3: #{mlp_lora_forward.1} parent=1 // pred_check_branch
      %15 = sbr.rel (0) target = $region5
    $region4: #{mlp_lora_forward.1} parent=1 // pred_region
      %s17 = ssub.s32 128, 128
      %18 = vsyncadd [#allocation5], %s17
      %s19 = sshll.u32 [#allocation4], 4
      %s20 = int_to_ptr.vmem [resolvable:$true] %s19
      %25 = dma.hbm_to_vmem [thread:$0]  %s0, 128, %s20, [#allocation5], 64, 64, 4
    $region5: #{mlp_lora_forward.1} parent=1 // pred_fallthru
      _
    // Predicated region
    $region6: #{mlp_lora_forward.1} parent=1 // pred_check
      _
    $region7: #{mlp_lora_forward.1} parent=1 // pred_check_branch
      %27 = sbr.rel (0) target = $region9
    $region8: #{mlp_lora_forward.1} parent=1 // pred_region
      %s29 = ssub.s32 256, 256
      %30 = vsyncadd [#allocation8], %s29
      %s31 = sshll.u32 [#allocation7], 4
      %s32 = int_to_ptr.vmem [resolvable:$true] %s31
      %37 = dma.hbm_to_vmem [thread:$0]  %s1, 256, %s32, [#allocation8], 64, 64, 4
    $region9: #{mlp_lora_forward.1} parent=1 // pred_fallthru
      _
    // Predicated region
    $region10: #{mlp_lora_forward.1} parent=1 // pred_check
      _
    $region11: #{mlp_lora_forward.1} parent=1 // pred_check_branch
      %39 = sbr.rel (0) target = $region13
    $region12: #{mlp_lora_forward.1} parent=1 // pred_region
      %s41 = ssub.s32 1024, 1024
      %42 = vsyncadd [#allocation8], %s41
      %s43 = sshll.u32 [#allocation9], 4
      %s44 = int_to_ptr.vmem [resolvable:$true] %s43
      %49 = dma.hbm_to_vmem [thread:$0]  %s2, 1024, %s44, [#allocation8], 64, 64, 4
    $region13: #{mlp_lora_forward.1} parent=1 // pred_fallthru
      _
    // Predicated region
    $region14: #{mlp_lora_forward.1} parent=1 // pred_check
      _
    $region15: #{mlp_lora_forward.1} parent=1 // pred_check_branch
      %51 = sbr.rel (0) target = $region17
    $region16: #{mlp_lora_forward.1} parent=1 // pred_region
      %s53 = ssub.s32 512, 512
      %54 = vsyncadd [#allocation11], %s53
      %s55 = sshll.u32 [#allocation10], 4
      %s56 = int_to_ptr.vmem [resolvable:$true] %s55
      %61 = dma.hbm_to_vmem [thread:$0]  %s3, 512, %s56, [#allocation11], 64, 64, 4
    $region17: #{mlp_lora_forward.1} parent=1 // pred_fallthru
      _
    // Predicated region
    $region18: #{mlp_lora_forward.1} parent=1 // pred_check
      _
    $region19: #{mlp_lora_forward.1} parent=1 // pred_check_branch
      %63 = sbr.rel (0) target = $region21
    $region20: #{mlp_lora_forward.1} parent=1 // pred_region
      %s65 = ssub.s32 1024, 1024
      %66 = vsyncadd [#allocation11], %s65
      %s67 = sshll.u32 [#allocation12], 4
      %s68 = int_to_ptr.vmem [resolvable:$true] %s67
      %73 = dma.hbm_to_vmem [thread:$0]  %s4, 1024, %s68, [#allocation11], 64, 64, 4
    $region21: #{mlp_lora_forward.1} parent=1 // pred_fallthru
      _
    // Predicated region
    $region22: #{mlp_lora_forward.1} parent=1 // pred_check
      _
    $region23: #{mlp_lora_forward.1} parent=1 // pred_check_branch
      %75 = sbr.rel (0) target = $region25
    $region24: #{mlp_lora_forward.1} parent=1 // pred_region
      %76 = dma.done [#allocation5], 128
    $region25: #{mlp_lora_forward.1} parent=1 // pred_fallthru
      _
    // Predicated region
    $region26: #{mlp_lora_forward.1} parent=1 // pred_check
      _
    $region27: #{mlp_lora_forward.1} parent=1 // pred_check_branch
      %78 = sbr.rel (0) target = $region29
    $region28: #{mlp_lora_forward.1} parent=1 // pred_region
      %79 = dma.done [#allocation8], 256
    $region29: #{mlp_lora_forward.1} parent=1 // pred_fallthru
      _
    // Predicated region
    $region30: #{mlp_lora_forward.1} parent=1 // pred_check
      _
    $region31: #{mlp_lora_forward.1} parent=1 // pred_check_branch
      %81 = sbr.rel (0) target = $region33
    $region32: #{mlp_lora_forward.1} parent=1 // pred_region
      %82 = dma.done [#allocation8], 1024
    $region33: #{mlp_lora_forward.1} parent=1 // pred_fallthru
      _
    // Predicated region
    $region34: #{mlp_lora_forward.1} parent=1 // pred_check
      _
    $region35: #{mlp_lora_forward.1} parent=1 // pred_check_branch
      %84 = sbr.rel (0) target = $region37
    $region36: #{mlp_lora_forward.1} parent=1 // pred_region
      %85 = dma.done [#allocation11], 512
    $region37: #{mlp_lora_forward.1} parent=1 // pred_fallthru
      _
    // Predicated region
    $region38: #{mlp_lora_forward.1} parent=1 // pred_check
      _
    $region39: #{mlp_lora_forward.1} parent=1 // pred_check_branch
      %87 = sbr.rel (0) target = $region41
    $region40: #{mlp_lora_forward.1} parent=1 // pred_region
      %88 = dma.done [#allocation11], 1024
    $region41: #{mlp_lora_forward.1} parent=1 // pred_fallthru
      _
    %p90 = scmp.eq.s32.totalorder 0, 0
    // Predicated region
    $region42: #{mlp_lora_forward.1} parent=1 // pred_check
      %p91 = pneg %p90
    $region43: #{mlp_lora_forward.1} parent=1 // pred_check_branch
      %93 = sbr.rel (%p91) target = $region45
    $region44: #{mlp_lora_forward.1} parent=1 // pred_region
      %v94 = vld [vmem:[#allocation4] sm:$0xf]
      %v95 = vld [vmem:[#allocation4 + $0x4] sm:$0xf]
      %v96 = vld [vmem:[#allocation7] sm:$0xf]
      %v97 = vld [vmem:[#allocation7 + $0x4] sm:$0xf]
      %v98 = vld [vmem:[#allocation7 + $0x8] sm:$0xf]
      %v99 = vld [vmem:[#allocation7 + $0xc] sm:$0xf]
      %v102 = vunpack.c.l.b16 %v94
      %v103 = vunpack.c.l.b16 %v95
      %v104 = vpack.c.b16 %v103, %v102
      %v109 = vunpack.c.l.b16 %v96
      %v110 = vunpack.c.l.b16 %v97
      %v111 = vunpack.c.l.b16 %v98
      %v112 = vunpack.c.l.b16 %v99
      %v113 = vpack.c.b16 %v110, %v109
      %v114 = vpack.c.b16 %v112, %v111
      %vm117 = vcmask 261120
      %v119 = vsel %vm117, %v104, 0
      %121 = vmatprep.subr.bf16.mxu0 0
      %122 = vmatpush1.bf16.msra.mxu0 %v113
      %123 = vmatprep.subr.bf16.mxu0 0
      %124 = vmatpush1.bf16.msra.mxu0 %v114
      %125 = vmatprep.subr.bf16.mxu0 0
      %126 = vmatpush1.bf16.msra.mxu0 0
      %127 = vmatprep.subr.bf16.mxu0 0
      %128 = vmatpush1.bf16.msra.mxu0 0
      %129 = vmatprep.subr.bf16.mxu0 0
      %130 = vmatpush1.bf16.msra.mxu0 0
      %131 = vmatprep.subr.bf16.mxu0 0
      %132 = vmatpush1.bf16.msra.mxu0 0
      %133 = vmatprep.subr.bf16.mxu0 0
      %134 = vmatpush1.bf16.msra.mxu0 0
      %135 = vmatprep.subr.bf16.mxu0 0
      %136 = vmatpush1.bf16.msra.mxu0 0
      %137 = vmatprep.subr.bf16.mxu0 0
      %138 = vmatpush1.bf16.msra.mxu0 0
      %139 = vmatprep.subr.bf16.mxu0 0
      %140 = vmatpush1.bf16.msra.mxu0 0
      %141 = vmatprep.subr.bf16.mxu0 0
      %142 = vmatpush1.bf16.msra.mxu0 0
      %143 = vmatprep.subr.bf16.mxu0 0
      %144 = vmatpush1.bf16.msra.mxu0 0
      %145 = vmatprep.subr.bf16.mxu0 0
      %146 = vmatpush1.bf16.msra.mxu0 0
      %147 = vmatprep.subr.bf16.mxu0 0
      %148 = vmatpush1.bf16.msra.mxu0 0
      %149 = vmatprep.subr.bf16.mxu0 0
      %150 = vmatpush1.bf16.msra.mxu0 0
      %151 = vmatprep.subr.bf16.mxu0 0
      %152 = vmatpush1.bf16.msra.mxu0 0
      %153 = vmatprep.mubr.bf16.mxu0 0
      %154 = vmatmul.mubr.bf16.gmra.mrb[0].mxu0 %v119
      %v155 = vpop.f32.mrb[0].mxu0
      %v156 = vadd.f32 0.0, %v155
      %v157 = vpop.f32.mrb[0].mxu0
      %v158 = vpop.f32.mrb[0].mxu0
      %v159 = vadd.f32 0.0, %v158
      %v160 = vpop.f32.mrb[0].mxu0
      %161 = vdwg.mxu0
      %v162 = vpack.c.bf16 %v159, %v156
      %163 = vst [vmem:[#allocation2] sm:$0xff] %v162
      %164 = vst [vmem:[#allocation3] sm:$0xff] 0.0
      %165 = vst [vmem:[#allocation3 + $0x8] sm:$0xff] 0.0
    $region45: #{mlp_lora_forward.1} parent=1 // pred_fallthru
      _
    %v166 = vld [vmem:[#allocation2] sm:$0xff]
    %v167 = vld [vmem:[#allocation9] sm:$0xf]
    %v168 = vld [vmem:[#allocation9 + $0x4] sm:$0xf]
    %v169 = vld [vmem:[#allocation9 + $0x8] sm:$0xf]
    %v170 = vld [vmem:[#allocation9 + $0xc] sm:$0xf]
    %v171 = vld [vmem:[#allocation9 + $0x10] sm:$0xf]
    %v172 = vld [vmem:[#allocation9 + $0x14] sm:$0xf]
    %v173 = vld [vmem:[#allocation9 + $0x18] sm:$0xf]
    %v174 = vld [vmem:[#allocation9 + $0x1c] sm:$0xf]
    %v175 = vld [vmem:[#allocation9 + $0x20] sm:$0xf]
    %v176 = vld [vmem:[#allocation9 + $0x24] sm:$0xf]
    %v177 = vld [vmem:[#allocation9 + $0x28] sm:$0xf]
    %v178 = vld [vmem:[#allocation9 + $0x2c] sm:$0xf]
    %v179 = vld [vmem:[#allocation9 + $0x30] sm:$0xf]
    %v180 = vld [vmem:[#allocation9 + $0x34] sm:$0xf]
    %v181 = vld [vmem:[#allocation9 + $0x38] sm:$0xf]
    %v182 = vld [vmem:[#allocation9 + $0x3c] sm:$0xf]
    %v199 = vunpack.c.l.b16 %v167
    %v200 = vunpack.c.l.b16 %v168
    %v201 = vunpack.c.l.b16 %v169
    %v202 = vunpack.c.l.b16 %v170
    %v203 = vunpack.c.l.b16 %v171
    %v204 = vunpack.c.l.b16 %v172
    %v205 = vunpack.c.l.b16 %v173
    %v206 = vunpack.c.l.b16 %v174
    %v207 = vunpack.c.l.b16 %v175
    %v208 = vunpack.c.l.b16 %v176
    %v209 = vunpack.c.l.b16 %v177
    %v210 = vunpack.c.l.b16 %v178
    %v211 = vunpack.c.l.b16 %v179
    %v212 = vunpack.c.l.b16 %v180
    %v213 = vunpack.c.l.b16 %v181
    %v214 = vunpack.c.l.b16 %v182
    %v215 = vpack.c.b16 %v200, %v199
    %v216 = vpack.c.b16 %v202, %v201
    %v217 = vpack.c.b16 %v204, %v203
    %v218 = vpack.c.b16 %v206, %v205
    %v219 = vpack.c.b16 %v208, %v207
    %v220 = vpack.c.b16 %v210, %v209
    %v221 = vpack.c.b16 %v212, %v211
    %v222 = vpack.c.b16 %v214, %v213
    %231 = vmatprep.subr.bf16.mxu0 0
    %232 = vmatpush1.bf16.msra.mxu0 %v215
    %233 = vmatprep.subr.bf16.mxu0 0
    %234 = vmatpush1.bf16.msra.mxu0 %v216
    %235 = vmatprep.subr.bf16.mxu0 0
    %236 = vmatpush1.bf16.msra.mxu0 %v217
    %237 = vmatprep.subr.bf16.mxu0 0
    %238 = vmatpush1.bf16.msra.mxu0 %v218
    %239 = vmatprep.subr.bf16.mxu0 0
    %240 = vmatpush1.bf16.msra.mxu0 %v219
    %241 = vmatprep.subr.bf16.mxu0 0
    %242 = vmatpush1.bf16.msra.mxu0 %v220
    %243 = vmatprep.subr.bf16.mxu0 0
    %244 = vmatpush1.bf16.msra.mxu0 %v221
    %245 = vmatprep.subr.bf16.mxu0 0
    %246 = vmatpush1.bf16.msra.mxu0 %v222
    %247 = vmatprep.subr.bf16.mxu0 0
    %248 = vmatpush1.bf16.msra.mxu0 0
    %249 = vmatprep.subr.bf16.mxu0 0
    %250 = vmatpush1.bf16.msra.mxu0 0
    %251 = vmatprep.subr.bf16.mxu0 0
    %252 = vmatpush1.bf16.msra.mxu0 0
    %253 = vmatprep.subr.bf16.mxu0 0
    %254 = vmatpush1.bf16.msra.mxu0 0
    %255 = vmatprep.subr.bf16.mxu0 0
    %256 = vmatpush1.bf16.msra.mxu0 0
    %257 = vmatprep.subr.bf16.mxu0 0
    %258 = vmatpush1.bf16.msra.mxu0 0
    %259 = vmatprep.subr.bf16.mxu0 0
    %260 = vmatpush1.bf16.msra.mxu0 0
    %261 = vmatprep.subr.bf16.mxu0 0
    %262 = vmatpush1.bf16.msra.mxu0 0
    %263 = vmatprep.mubr.bf16.mxu0 0
    %264 = vmatmul.mubr.bf16.gmra.mrb[0].mxu0 %v166
    %v265 = vpop.f32.mrb[0].mxu0
    %v266 = vadd.f32 0.0, %v265
    %v267 = vpop.f32.mrb[0].mxu0
    %v268 = vpop.f32.mrb[0].mxu0
    %v269 = vadd.f32 0.0, %v268
    %v270 = vpop.f32.mrb[0].mxu0
    %271 = vdwg.mxu0
    %v272 = vmul.f32 %v266, %v266
    %v273 = vmul.f32 %v269, %v269
    %v274 = vld [vmem:[#allocation3] sm:$0xff]
    %v275 = vld [vmem:[#allocation3 + $0x8] sm:$0xff]
    %v276 = vpack.c.bf16 %v273, %v272
    %v277 = vld [vmem:[#allocation10] sm:$0xf]
    %v278 = vld [vmem:[#allocation10 + $0x4] sm:$0xf]
    %v279 = vld [vmem:[#allocation10 + $0x8] sm:$0xf]
    %v280 = vld [vmem:[#allocation10 + $0xc] sm:$0xf]
    %v281 = vld [vmem:[#allocation10 + $0x10] sm:$0xf]
    %v282 = vld [vmem:[#allocation10 + $0x14] sm:$0xf]
    %v283 = vld [vmem:[#allocation10 + $0x18] sm:$0xf]
    %v284 = vld [vmem:[#allocation10 + $0x1c] sm:$0xf]
    %v293 = vunpack.c.l.b16 %v277
    %v294 = vunpack.c.l.b16 %v278
    %v295 = vunpack.c.l.b16 %v279
    %v296 = vunpack.c.l.b16 %v280
    %v297 = vunpack.c.l.b16 %v281
    %v298 = vunpack.c.l.b16 %v282
    %v299 = vunpack.c.l.b16 %v283
    %v300 = vunpack.c.l.b16 %v284
    %v301 = vpack.c.b16 %v294, %v293
    %v302 = vpack.c.b16 %v296, %v295
    %v303 = vpack.c.b16 %v298, %v297
    %v304 = vpack.c.b16 %v300, %v299
    %vm309 = vcmask 523264
    %v311 = vsel %vm309, %v276, 0
    %313 = vmatprep.subr.bf16.mxu0 0
    %314 = vmatpush1.bf16.msra.mxu0 %v301
    %315 = vmatprep.subr.bf16.mxu0 0
    %316 = vmatpush1.bf16.msra.mxu0 %v302
    %317 = vmatprep.subr.bf16.mxu0 0
    %318 = vmatpush1.bf16.msra.mxu0 %v303
    %319 = vmatprep.subr.bf16.mxu0 0
    %320 = vmatpush1.bf16.msra.mxu0 %v304
    %321 = vmatprep.subr.bf16.mxu0 0
    %322 = vmatpush1.bf16.msra.mxu0 0
    %323 = vmatprep.subr.bf16.mxu0 0
    %324 = vmatpush1.bf16.msra.mxu0 0
    %325 = vmatprep.subr.bf16.mxu0 0
    %326 = vmatpush1.bf16.msra.mxu0 0
    %327 = vmatprep.subr.bf16.mxu0 0
    %328 = vmatpush1.bf16.msra.mxu0 0
    %329 = vmatprep.subr.bf16.mxu0 0
    %330 = vmatpush1.bf16.msra.mxu0 0
    %331 = vmatprep.subr.bf16.mxu0 0
    %332 = vmatpush1.bf16.msra.mxu0 0
    %333 = vmatprep.subr.bf16.mxu0 0
    %334 = vmatpush1.bf16.msra.mxu0 0
    %335 = vmatprep.subr.bf16.mxu0 0
    %336 = vmatpush1.bf16.msra.mxu0 0
    %337 = vmatprep.subr.bf16.mxu0 0
    %338 = vmatpush1.bf16.msra.mxu0 0
    %339 = vmatprep.subr.bf16.mxu0 0
    %340 = vmatpush1.bf16.msra.mxu0 0
    %341 = vmatprep.subr.bf16.mxu0 0
    %342 = vmatpush1.bf16.msra.mxu0 0
    %343 = vmatprep.subr.bf16.mxu0 0
    %344 = vmatpush1.bf16.msra.mxu0 0
    %345 = vmatprep.mubr.bf16.mxu0 0
    %346 = vmatmul.mubr.bf16.gmra.mrb[0].mxu0 %v311
    %v347 = vpop.f32.mrb[0].mxu0
    %v348 = vadd.f32 0.0, %v347
    %v349 = vpop.f32.mrb[0].mxu0
    %v350 = vpop.f32.mrb[0].mxu0
    %v351 = vadd.f32 0.0, %v350
    %v352 = vpop.f32.mrb[0].mxu0
    %353 = vdwg.mxu0
    %v354 = vadd.f32 %v274, %v348
    %v355 = vadd.f32 %v275, %v351
    %356 = vst [vmem:[#allocation3] sm:$0xff] %v354
    %357 = vst [vmem:[#allocation3 + $0x8] sm:$0xff] %v355
    // Predicated region
    $region46: #{mlp_lora_forward.1} parent=1 // pred_check
      %p358 = pneg %p90
    $region47: #{mlp_lora_forward.1} parent=1 // pred_check_branch
      %360 = sbr.rel (%p358) target = $region49
    $region48: #{mlp_lora_forward.1} parent=1 // pred_region
      %v361 = vld [vmem:[#allocation3] sm:$0xff]
      %v362 = vld [vmem:[#allocation3 + $0x8] sm:$0xff]
      %v363 = vpack.c.bf16 %v362, %v361
      %v364 = vld [vmem:[#allocation12] sm:$0xf]
      %v365 = vld [vmem:[#allocation12 + $0x4] sm:$0xf]
      %v366 = vld [vmem:[#allocation12 + $0x8] sm:$0xf]
      %v367 = vld [vmem:[#allocation12 + $0xc] sm:$0xf]
      %v368 = vld [vmem:[#allocation12 + $0x10] sm:$0xf]
      %v369 = vld [vmem:[#allocation12 + $0x14] sm:$0xf]
      %v370 = vld [vmem:[#allocation12 + $0x18] sm:$0xf]
      %v371 = vld [vmem:[#allocation12 + $0x1c] sm:$0xf]
      %v372 = vld [vmem:[#allocation12 + $0x20] sm:$0xf]
      %v373 = vld [vmem:[#allocation12 + $0x24] sm:$0xf]
      %v374 = vld [vmem:[#allocation12 + $0x28] sm:$0xf]
      %v375 = vld [vmem:[#allocation12 + $0x2c] sm:$0xf]
      %v376 = vld [vmem:[#allocation12 + $0x30] sm:$0xf]
      %v377 = vld [vmem:[#allocation12 + $0x34] sm:$0xf]
      %v378 = vld [vmem:[#allocation12 + $0x38] sm:$0xf]
      %v379 = vld [vmem:[#allocation12 + $0x3c] sm:$0xf]
      %v396 = vunpack.c.l.b16 %v364
      %v397 = vunpack.c.l.b16 %v365
      %v398 = vunpack.c.l.b16 %v366
      %v399 = vunpack.c.l.b16 %v367
      %v400 = vunpack.c.l.b16 %v368
      %v401 = vunpack.c.l.b16 %v369
      %v402 = vunpack.c.l.b16 %v370
      %v403 = vunpack.c.l.b16 %v371
      %v404 = vunpack.c.l.b16 %v372
      %v405 = vunpack.c.l.b16 %v373
      %v406 = vunpack.c.l.b16 %v374
      %v407 = vunpack.c.l.b16 %v375
      %v408 = vunpack.c.l.b16 %v376
      %v409 = vunpack.c.l.b16 %v377
      %v410 = vunpack.c.l.b16 %v378
      %v411 = vunpack.c.l.b16 %v379
      %v412 = vpack.c.b16 %v397, %v396
      %v413 = vpack.c.b16 %v399, %v398
      %v414 = vpack.c.b16 %v401, %v400
      %v415 = vpack.c.b16 %v403, %v402
      %v416 = vpack.c.b16 %v405, %v404
      %v417 = vpack.c.b16 %v407, %v406
      %v418 = vpack.c.b16 %v409, %v408
      %v419 = vpack.c.b16 %v411, %v410
      %428 = vmatprep.subr.bf16.mxu0 0
      %429 = vmatpush1.bf16.msra.mxu0 %v412
      %430 = vmatprep.subr.bf16.mxu0 0
      %431 = vmatpush1.bf16.msra.mxu0 %v413
      %432 = vmatprep.subr.bf16.mxu0 0
      %433 = vmatpush1.bf16.msra.mxu0 %v414
      %434 = vmatprep.subr.bf16.mxu0 0
      %435 = vmatpush1.bf16.msra.mxu0 %v415
      %436 = vmatprep.subr.bf16.mxu0 0
      %437 = vmatpush1.bf16.msra.mxu0 %v416
      %438 = vmatprep.subr.bf16.mxu0 0
      %439 = vmatpush1.bf16.msra.mxu0 %v417
      %440 = vmatprep.subr.bf16.mxu0 0
      %441 = vmatpush1.bf16.msra.mxu0 %v418
      %442 = vmatprep.subr.bf16.mxu0 0
      %443 = vmatpush1.bf16.msra.mxu0 %v419
      %444 = vmatprep.subr.bf16.mxu0 0
      %445 = vmatpush1.bf16.msra.mxu0 0
      %446 = vmatprep.subr.bf16.mxu0 0
      %447 = vmatpush1.bf16.msra.mxu0 0
      %448 = vmatprep.subr.bf16.mxu0 0
      %449 = vmatpush1.bf16.msra.mxu0 0
      %450 = vmatprep.subr.bf16.mxu0 0
      %451 = vmatpush1.bf16.msra.mxu0 0
      %452 = vmatprep.subr.bf16.mxu0 0
      %453 = vmatpush1.bf16.msra.mxu0 0
      %454 = vmatprep.subr.bf16.mxu0 0
      %455 = vmatpush1.bf16.msra.mxu0 0
      %456 = vmatprep.subr.bf16.mxu0 0
      %457 = vmatpush1.bf16.msra.mxu0 0
      %458 = vmatprep.subr.bf16.mxu0 0
      %459 = vmatpush1.bf16.msra.mxu0 0
      %460 = vmatprep.mubr.bf16.mxu0 0
      %461 = vmatmul.mubr.bf16.gmra.mrb[0].mxu0 %v363
      %v462 = vpop.f32.mrb[0].mxu0
      %v463 = vadd.f32 0.0, %v462
      %v464 = vpop.f32.mrb[0].mxu0
      %v465 = vpop.f32.mrb[0].mxu0
      %v466 = vadd.f32 0.0, %v465
      %v467 = vpop.f32.mrb[0].mxu0
      %468 = vdwg.mxu0
      %vm469 = vcmask 130048
      %470 = vst.msk [vmem:[#allocation13] sm:$0xff] %vm469, %v463
      %471 = vst.msk [vmem:[#allocation13 + $0x8] sm:$0xff] %vm469, %v466
    $region49: #{mlp_lora_forward.1} parent=1 // pred_fallthru
      _
    // Predicated region
    $region50: #{mlp_lora_forward.1} parent=1 // pred_check
      _
    $region51: #{mlp_lora_forward.1} parent=1 // pred_check_branch
      %473 = sbr.rel (0) target = $region53
    $region52: #{mlp_lora_forward.1} parent=1 // pred_region
      %s475 = ssub.s32 256, 256
      %476 = vsyncadd [#allocation6], %s475
      %s477 = sshll.u32 [#allocation13], 4
      %s478 = int_to_ptr.vmem [resolvable:$true] %s477
      %483 = dma.vmem_to_hbm [thread:$0]  %s478, 256, %s5, [#allocation6], 128, 128, 8
    $region53: #{mlp_lora_forward.1} parent=1 // pred_fallthru
      _
    // Predicated region
    $region54: #{mlp_lora_forward.1} parent=1 // pred_check
      _
    $region55: #{mlp_lora_forward.1} parent=1 // pred_check_branch
      %485 = sbr.rel (0) target = $region57
    $region56: #{mlp_lora_forward.1} parent=1 // pred_region
      %486 = dma.done [#allocation6], 256
    $region57: #{mlp_lora_forward.1} parent=1 // pred_fallthru
      _
    %487 = vsyncpa [#allocation5], 1
    %488 = vsyncpa [#allocation8], 1
    %489 = vsyncpa [#allocation11], 1
    %490 = vsyncpa [#allocation6], 1

</llo_original>
